<compile_context>
chip_gen: v7x
topology: tpu7x:2x2x1
jax: 0.10.0
libtpu: 0.0.40
codegen_flags: <defaults>
</compile_context>

<pallas_src>
import math
from functools import partial

import jax
import jax.numpy as jnp
from jax import lax
from jax.experimental import pallas as pl
from jax.experimental.pallas import tpu as pltpu


# ----------------------------------------------------------------------------
# helpers
# ----------------------------------------------------------------------------
def _round_up(x: int, m: int) -> int:
    return ((x + m - 1) // m) * m


def _pick_tile(full: int, pref: int, align: int) -> int:
    """Largest tile <= pref that is a multiple of `align` and divides `full`.

    Falls back to the full extent (single tile) when the dim is small or no
    aligned divisor exists; a full-extent block always satisfies the TPU
    (8, 128) block constraint.
    """
    if full <= pref:
        return full
    t = (pref // align) * align
    while t >= align:
        if full % t == 0:
            return t
        t -= align
    return full


def _vmem_capacity_bytes() -> int:
    try:
        return int(pltpu.get_tpu_info().vmem_capacity_bytes)
    except Exception:
        return 64 << 20  # conservative (v7x per-TC VMEM)


def _vmem_limit(bytes_needed: int) -> int:
    # Generation-aware scoped-VMEM limit: leave ~8 MiB of physical headroom.
    cap = _vmem_capacity_bytes()
    return int(min(max(bytes_needed + (4 << 20), 16 << 20), cap - (8 << 20)))


def _use_bf16_exp() -> bool:
    # bf16 EUP path exists on v6e / v7x; keep exp in f32 on v5e / unknown chips.
    try:
        kind = jax.devices()[0].device_kind.lower()
    except Exception:
        return False
    return ("v6" in kind) or ("v7" in kind) or ("7x" in kind)


# ----------------------------------------------------------------------------
# Pallas kernels: linear projection (bf16 operands, f32 accumulation)
# ----------------------------------------------------------------------------
def _linear_kernel_out_acc(x_ref, w_ref, o_ref):
    # f32 output block is k-invariant (VMEM-resident across the k axis):
    # accumulate directly into it, no scratch and no final copy.
    @pl.when(pl.program_id(2) == 0)
    def _():
        o_ref[...] = jnp.zeros_like(o_ref)

    o_ref[...] += jnp.dot(x_ref[...], w_ref[...],
                          preferred_element_type=jnp.float32)


def _linear_kernel_scratch_acc(x_ref, w_ref, o_ref, acc_ref):
    # Non-f32 output: keep the running sum in an f32 VMEM accumulator.
    @pl.when(pl.program_id(2) == 0)
    def _():
        acc_ref[...] = jnp.zeros_like(acc_ref)

    acc_ref[...] += jnp.dot(x_ref[...], w_ref[...],
                            preferred_element_type=jnp.float32)

    @pl.when(pl.program_id(2) == pl.num_programs(2) - 1)
    def _():
        o_ref[...] = acc_ref[...].astype(o_ref.dtype)


def linear_pallas(x2d: jax.Array, w_kn: jax.Array, *, out_dtype=jnp.float32):
    """x2d: [M, K] bf16, w_kn: [K, N] bf16 (pre-transposed) -> [M, N] out_dtype."""
    M, K = x2d.shape
    K2, N = w_kn.shape
    assert K == K2
    assert x2d.dtype == jnp.bfloat16 and w_kn.dtype == jnp.bfloat16

    # Bigger panels where VMEM allows it (v5e/v6e: 128 MiB); conservative on v7x.
    big_vmem = _vmem_capacity_bytes() >= (96 << 20)
    tm = _pick_tile(M, 1024 if big_vmem else 512, 8)
    tn = _pick_tile(N, 1024 if big_vmem else 512, 128)
    tk = _pick_tile(K, 512, 128)
    grid = (M // tm, N // tn, K // tk)

    out_is_f32 = jnp.dtype(out_dtype) == jnp.dtype(jnp.float32)
    kernel = _linear_kernel_out_acc if out_is_f32 else _linear_kernel_scratch_acc
    scratch = [] if out_is_f32 else [pltpu.VMEM((tm, tn), jnp.float32)]

    ob = jnp.dtype(out_dtype).itemsize
    vmem = (2 * (tm * tk * 2 + tk * tn * 2 + tm * tn * ob)
            + (0 if out_is_f32 else tm * tn * 4))
    cost = pl.CostEstimate(
        flops=2 * M * N * K,
        transcendentals=0,
        bytes_accessed=M * K * 2 + K * N * 2 + M * N * ob,
    )
    return pl.pallas_call(
        kernel,
        out_shape=jax.ShapeDtypeStruct((M, N), out_dtype),
        grid=grid,
        in_specs=[
            pl.BlockSpec((tm, tk), lambda i, j, k: (i, k)),
            pl.BlockSpec((tk, tn), lambda i, j, k: (k, j)),
        ],
        out_specs=pl.BlockSpec((tm, tn), lambda i, j, k: (i, j)),
        scratch_shapes=scratch,
        compiler_params=pltpu.CompilerParams(
            dimension_semantics=("parallel", "parallel", "arbitrary"),
            vmem_limit_bytes=_vmem_limit(vmem),
        ),
        cost_estimate=cost,
    )(x2d, w_kn)


# ----------------------------------------------------------------------------
# Pallas kernel: causal flash attention (bf16 in/out, f32 accumulation)
# ----------------------------------------------------------------------------
def _flash_attn_kernel(q_ref, k_ref, v_ref, o_ref, qs_ref, acc_ref, m_ref, l_ref,
                       *, n_heads, head_dim, scale, tq, tk, exp_bf16):
    # q_ref: [1, tq, H] bf16, k_ref/v_ref: [1, tk, H] bf16, o_ref: [1, tq, H] bf16
    # qs_ref : [n_heads, tq, D] bf16   staged scale*q (written once per q block)
    # acc_ref: [n_heads, tq, D] f32    output accumulator (leading-dim indexed)
    # m_ref/l_ref: [tq, n_heads] f32   running max / denominator (lane-dense)
    qi = pl.program_id(1)
    ki = pl.program_id(2)
    q_start = qi * tq
    k_start = ki * tk

    @pl.when(ki == 0)
    def _():
        acc_ref[...] = jnp.zeros_like(acc_ref)
        m_ref[...] = jnp.full_like(m_ref, -jnp.inf)
        l_ref[...] = jnp.zeros_like(l_ref)
        # Hoisted out of the KV loop: scale*q staged per head ONCE per q block.
        for h in range(n_heads):
            lo, hi = h * head_dim, (h + 1) * head_dim
            qs_ref[h] = (q_ref[0, :, lo:hi] * scale).astype(jnp.bfloat16)

    def process(masked: bool):
        if masked:
            row = q_start + lax.broadcasted_iota(jnp.int32, (tq, tk), 0)
            col = k_start + lax.broadcasted_iota(jnp.int32, (tq, tk), 1)
            causal = col <= row
        # Static head loop; K/V head slices are lane-aligned whenever head_dim
        # is a multiple of 128 (the common case).
        # TODO(synk): for head_dim < 128 a [B, n_heads, S, D] layout with a head
        # grid axis would remove the sub-128 lane slices of k/v entirely.
        for h in range(n_heads):
            lo, hi = h * head_dim, (h + 1) * head_dim
            kh = k_ref[0, :, lo:hi]                          # [tk, D] bf16
            s = lax.dot_general(qs_ref[h], kh,               # [tq, tk] f32
                                (((1,), (1,)), ((), ())),
                                preferred_element_type=jnp.float32)
            if masked:
                s = jnp.where(causal, s, -jnp.inf)
            m_prev = m_ref[:, h:h + 1]                       # [tq, 1]
            m_new = jnp.maximum(m_prev, jnp.max(s, axis=-1, keepdims=True))
            alpha = jnp.exp(m_prev - m_new)
            if exp_bf16:
                # v6e/v7x: EUP has a bf16 path; p was headed to bf16 anyway.
                p_mxu = jnp.exp((s - m_new).astype(jnp.bfloat16))
                p_sum = jnp.sum(p_mxu.astype(jnp.float32), axis=-1, keepdims=True)
            else:
                p = jnp.exp(s - m_new)
                p_sum = jnp.sum(p, axis=-1, keepdims=True)
                p_mxu = p.astype(jnp.bfloat16)
            l_ref[:, h:h + 1] = alpha * l_ref[:, h:h + 1] + p_sum
            m_ref[:, h:h + 1] = m_new
            acc_ref[h] = alpha * acc_ref[h] + jnp.dot(
                p_mxu, v_ref[0, :, lo:hi], preferred_element_type=jnp.float32)

    # Causal tiling: tiles fully above the diagonal are skipped entirely (and
    # their K/V DMAs elided by the clamped index_map); fully-below tiles take a
    # mask-free fast path (no iota / vselect); only the diagonal tile masks.
    below_diag = (k_start + (tk - 1)) <= q_start
    on_diag = jnp.logical_and(k_start <= q_start + (tq - 1),
                              jnp.logical_not(below_diag))

    @pl.when(below_diag)
    def _():
        process(masked=False)

    @pl.when(on_diag)
    def _():
        process(masked=True)

    @pl.when(ki == pl.num_programs(2) - 1)
    def _():
        for h in range(n_heads):
            lo, hi = h * head_dim, (h + 1) * head_dim
            inv_l = pl.reciprocal(l_ref[:, h:h + 1], approx=True)   # EUP slot
            o_ref[0, :, lo:hi] = (acc_ref[h] * inv_l).astype(o_ref.dtype)


def attention_pallas(q: jax.Array, k: jax.Array, v: jax.Array, *, n_heads: int,
                     t_pref: int = 256) -> jax.Array:
    """q, k, v: [B, S, H] -> causal MHA output [B, S, H] bf16 (heads packed in H)."""
    B, S, H = q.shape
    head_dim = H // n_heads
    scale = 1.0 / math.sqrt(head_dim)

    # bf16 operands end-to-end (no-op cast when already bf16; one convert when
    # a steering add promoted them to f32). All softmax state stays f32.
    q = q.astype(jnp.bfloat16)
    k = k.astype(jnp.bfloat16)
    v = v.astype(jnp.bfloat16)

    # One tile size for q and kv (required for the causal DMA clamp below),
    # lane-aligned to 128 when S allows.
    t = _pick_tile(S, t_pref, 128)
    grid = (B, S // t, S // t)

    q_spec = pl.BlockSpec((1, t, H), lambda b, qi, ki: (b, qi, 0))
    # Fully-masked KV tiles (ki > qi) re-reference the previous block index so
    # Pallas elides their HBM->VMEM copies (~2x less K/V traffic).
    kv_spec = pl.BlockSpec((1, t, H), lambda b, qi, ki: (b, jnp.minimum(ki, qi), 0))
    o_spec = pl.BlockSpec((1, t, H), lambda b, qi, ki: (b, qi, 0))

    d_pad = _round_up(head_dim, 128)
    t_pad = _round_up(t, 8)
    vmem = (2 * 4 * t * H * 2                               # q/k/v/o blocks, double-buffered, bf16
            + n_heads * t_pad * d_pad * (2 + 4)             # staged q (bf16) + acc (f32), lane-padded
            + 2 * t_pad * _round_up(n_heads, 128) * 4)      # m, l (lane-padded)
    cost = pl.CostEstimate(
        flops=2 * B * n_heads * S * S * head_dim,           # ~causal half of 4*S*S*D
        transcendentals=B * n_heads * S * S // 2,
        bytes_accessed=4 * B * S * H * 2,
    )
    return pl.pallas_call(
        partial(_flash_attn_kernel, n_heads=n_heads, head_dim=head_dim,
                scale=scale, tq=t, tk=t, exp_bf16=_use_bf16_exp()),
        out_shape=jax.ShapeDtypeStruct((B, S, H), jnp.bfloat16),
        grid=grid,
        in_specs=[q_spec, kv_spec, kv_spec],
        out_specs=o_spec,
        scratch_shapes=[
            pltpu.VMEM((n_heads, t, head_dim), jnp.bfloat16),  # staged scale*q
            pltpu.VMEM((n_heads, t, head_dim), jnp.float32),   # acc
            pltpu.VMEM((t, n_heads), jnp.float32),             # m (running max)
            pltpu.VMEM((t, n_heads), jnp.float32),             # l (running denom)
        ],
        compiler_params=pltpu.CompilerParams(
            dimension_semantics=("parallel", "parallel", "arbitrary"),
            vmem_limit_bytes=_vmem_limit(vmem),
        ),
        cost_estimate=cost,
    )(q, k, v)


# ----------------------------------------------------------------------------
# Wrapper modules (JAX equivalents of the PyTorch classes)
# ----------------------------------------------------------------------------
class LinearProj:
    """nn.Linear(hidden, hidden, bias=False); weight pre-transposed to [in, out] bf16."""

    def __init__(self, weight_oi: jax.Array, out_dtype=jnp.float32):
        self.weight_t = jnp.asarray(weight_oi).T.astype(jnp.bfloat16)  # [in, out]
        self.out_dtype = out_dtype
        self._staged = None  # slice of a fused QKV matmul for this projection

    def stage(self, y: jax.Array):
        self._staged = y

    def __call__(self, x: jax.Array) -> jax.Array:  # x: [B, S, H_in]
        if self._staged is not None:
            y, self._staged = self._staged, None
            return y
        B, S, H = x.shape
        x2 = x.reshape(B * S, H).astype(jnp.bfloat16)
        return linear_pallas(x2, self.weight_t,
                             out_dtype=self.out_dtype).reshape(B, S, -1)


class LinearWrapper:
    def __init__(self, proj):
        self.proj = proj
        self.activations = None
        self.add_activations = None

    def __call__(self, *args, **kwargs):
        output = self.proj(*args, **kwargs)
        self.activations = output  # clone: JAX arrays are immutable
        if self.add_activations is not None:
            output = output + self.add_activations
        return output

    def reset(self):
        self.activations = None
        self.add_activations = None

    def add(self, activations):
        self.add_activations = activations


def _unwrap(proj):
    return proj.proj if isinstance(proj, LinearWrapper) else proj


class MultiHeadSelfAttention:
    """LLaMA-style multi-head causal self-attention (no bias)."""
    # TODO(synk): the original attn module from lat/legacy/modeling.py is not
    # provided; rotary embeddings / KV cache are omitted.

    def __init__(self, hidden: int, n_heads: int, key: jax.Array):
        assert hidden % n_heads == 0
        self.hidden = hidden
        self.n_heads = n_heads
        self.head_dim = hidden // n_heads
        kq, kk, kv, ko = jax.random.split(key, 4)
        scale = 1.0 / math.sqrt(hidden)
        init = lambda k: jax.random.normal(k, (hidden, hidden), jnp.float32) * scale
        wq, wk, wv, wo = init(kq), init(kk), init(kv), init(ko)
        self.q_proj = LinearProj(wq, out_dtype=jnp.bfloat16)
        self.k_proj = LinearProj(wk, out_dtype=jnp.bfloat16)
        self.v_proj = LinearProj(wv, out_dtype=jnp.bfloat16)
        self.o_proj = LinearProj(wo, out_dtype=jnp.float32)
        # Fused QKV weight [H, 3H] (pre-transposed, bf16): one matmul for Q/K/V.
        self.w_qkv_t = jnp.concatenate([wq.T, wk.T, wv.T], axis=1).astype(jnp.bfloat16)

    def __call__(self, hidden_states: jax.Array):
        B, S, H = hidden_states.shape
        # Single bf16 cast of the layer input + one fused QKV pallas_call with a
        # bf16 output (half the QKV HBM writeback and attention read traffic).
        x2 = hidden_states.reshape(B * S, H).astype(jnp.bfloat16)
        qkv = linear_pallas(x2, self.w_qkv_t, out_dtype=jnp.bfloat16)
        qkv = qkv.reshape(B, S, 3 * H)
        # Stage each projection's slice so LinearWrapper (activation capture /
        # steering add) still intercepts exactly the per-projection output.
        _unwrap(self.q_proj).stage(qkv[..., 0:H])
        _unwrap(self.k_proj).stage(qkv[..., H:2 * H])
        _unwrap(self.v_proj).stage(qkv[..., 2 * H:3 * H])
        q = self.q_proj(hidden_states)
        k = self.k_proj(hidden_states)
        v = self.v_proj(hidden_states)

        # Flash-style causal attention on the lane-dense [B, S, H] layout.
        attn_out = attention_pallas(q, k, v, n_heads=self.n_heads)
        attn_out = self.o_proj(attn_out)
        return (attn_out, None)  # (attn_output, attn_weights)


class AttnWrapper:
    def __init__(self, attn: MultiHeadSelfAttention):
        self.attn = attn
        self.activations = None
        # Wrap q_proj and v_proj, exactly as the PyTorch module does.
        self.attn.q_proj = LinearWrapper(self.attn.q_proj)
        self.attn.v_proj = LinearWrapper(self.attn.v_proj)

    def __call__(self, *args, **kwargs):
        output = self.attn(*args, **kwargs)
        self.activations = output[0]
        return output


# ----------------------------------------------------------------------------
# Pure-JAX reference (matches this module: causal MHA, no rotary) for checking
# ----------------------------------------------------------------------------
def _reference_forward(x, mha, steer_q, steer_v):
    wq = _unwrap(mha.q_proj).weight_t.astype(jnp.float32)
    wk = _unwrap(mha.k_proj).weight_t.astype(jnp.float32)
    wv = _unwrap(mha.v_proj).weight_t.astype(jnp.float32)
    wo = _unwrap(mha.o_proj).weight_t.astype(jnp.float32)
    q = x @ wq + steer_q
    k = x @ wk
    v = x @ wv + steer_v
    B, S, H = x.shape
    nh, d = mha.n_heads, mha.head_dim

    def split(t):
        return t.reshape(B, S, nh, d).transpose(0, 2, 1, 3)

    qh, kh, vh = split(q), split(k), split(v)
    s = jnp.einsum("bhqd,bhkd->bhqk", qh, kh) / math.sqrt(d)
    mask = jnp.tril(jnp.ones((S, S), dtype=bool))
    s = jnp.where(mask, s, -jnp.inf)
    p = jax.nn.softmax(s, axis=-1)
    o = jnp.einsum("bhqk,bhkd->bhqd", p, vh).transpose(0, 2, 1, 3).reshape(B, S, H)
    return o @ wo


# ----------------------------------------------------------------------------
# Driver
# ----------------------------------------------------------------------------
if __name__ == "__main__":
    B, S, H, NH = 2, 8, 32, 4

    key = jax.random.PRNGKey(0)
    k_x, k_w, k_addq, k_addv = jax.random.split(key, 4)

    x = jax.random.normal(k_x, (B, S, H), jnp.float32)

    attn = MultiHeadSelfAttention(H, NH, k_w)
    wrapper = AttnWrapper(attn)

    # Exercise the LinearWrapper "add_activations" (steering vector) path.
    steer_q = 0.1 * jax.random.normal(k_addq, (B, S, H), jnp.float32)
    steer_v = 0.1 * jax.random.normal(k_addv, (B, S, H), jnp.float32)
    wrapper.attn.q_proj.add(steer_q)
    wrapper.attn.v_proj.add(steer_v)

    out = wrapper(x)

    attn_output = jax.block_until_ready(out[0])
    jax.block_until_ready(wrapper.activations)
    jax.block_until_ready(wrapper.attn.q_proj.activations)
    jax.block_until_ready(wrapper.attn.v_proj.activations)

    assert attn_output.shape == (B, S, H)
    assert attn_output.dtype == jnp.float32
    assert wrapper.attn.q_proj.activations.shape == (B, S, H)
    assert wrapper.attn.v_proj.activations.shape == (B, S, H)
    assert bool(jnp.all(jnp.isfinite(attn_output)))

    # Loose numerical check vs a pure-JAX reference (bf16 MXU operands + approx
    # softmax reciprocal in the kernels; a real bug would show O(1) errors).
    ref = _reference_forward(x, attn, steer_q, steer_v)
    max_err = float(jnp.max(jnp.abs(attn_output - ref)))
    assert max_err < 0.2, f"max abs error vs reference too large: {max_err}"

    print("KERNEL_OK")
</pallas_src>

<mosaic_0001>
module attributes {stable_mosaic.version = 11 : i64} {
  func.func @_linear_kernel_scratch_acc(%arg0: i32, %arg1: i32, %arg2: i32, %arg3: memref<16x32xbf16, #tpu.memory_space<vmem>>, %arg4: memref<32x96xbf16, #tpu.memory_space<vmem>>, %arg5: memref<16x96xbf16, #tpu.memory_space<vmem>>, %arg6: memref<16x96xf32, #tpu.memory_space<vmem>>) attributes {dimension_semantics = [#tpu.dimension_semantics<parallel>, #tpu.dimension_semantics<parallel>, #tpu.dimension_semantics<arbitrary>], iteration_bounds = array<i64: 1, 1, 1>, scalar_prefetch = 0 : i64, scratch_operands = 1 : i64, tpu.core_type = #tpu.core_type<tc>, window_params = [{transform_indices = @transform_0, window_bounds = array<i64: 16, 32>}, {transform_indices = @transform_1, window_bounds = array<i64: 32, 96>}, {transform_indices = @transform_2, window_bounds = array<i64: 16, 96>}]} {
    %c0_i32 = arith.constant 0 : i32
    %0 = arith.cmpi eq, %arg2, %c0_i32 : i32
    %1 = arith.extui %0 : i1 to i32
    %c0_i32_0 = arith.constant 0 : i32
    %2 = arith.cmpi ne, %1, %c0_i32_0 : i32
    scf.if %2 {
      %cst_10 = arith.constant 0.000000e+00 : f32
      %12 = vector.broadcast %cst_10 : f32 to vector<16x96xf32>
      %c0_11 = arith.constant 0 : index
      %c0_12 = arith.constant 0 : index
      %13 = vector.load %arg6[%c0_11, %c0_12] : memref<16x96xf32, #tpu.memory_space<vmem>>, vector<16x96xf32>
      tpu.vector_store %arg6[%c0_11, %c0_12], %12 {strides = array<i32>} : memref<16x96xf32, #tpu.memory_space<vmem>>, vector<16x96xf32>,
    } else {
    }
    %c0 = arith.constant 0 : index
    %c0_1 = arith.constant 0 : index
    %3 = vector.load %arg6[%c0, %c0_1] : memref<16x96xf32, #tpu.memory_space<vmem>>, vector<16x96xf32>
    %c0_2 = arith.constant 0 : index
    %c0_3 = arith.constant 0 : index
    %4 = vector.load %arg3[%c0_2, %c0_3] : memref<16x32xbf16, #tpu.memory_space<vmem>>, vector<16x32xbf16>
    %c0_4 = arith.constant 0 : index
    %c0_5 = arith.constant 0 : index
    %5 = vector.load %arg4[%c0_4, %c0_5] : memref<32x96xbf16, #tpu.memory_space<vmem>>, vector<32x96xbf16>
    %cst = arith.constant dense<0.000000e+00> : vector<16x96xf32>
    %6 = tpu.matmul %4, %5, %cst {dimension_numbers = #tpu.dot_dimension_numbers<[1], [0], [0], [1], [0, 0, 1, 1], [], []>} : vector<16x32xbf16>, vector<32x96xbf16>, vector<16x96xf32> -> vector<16x96xf32>
    %7 = arith.addf %3, %6 : vector<16x96xf32>
    %c0_6 = arith.constant 0 : index
    %c0_7 = arith.constant 0 : index
    %8 = vector.load %arg6[%c0_6, %c0_7] : memref<16x96xf32, #tpu.memory_space<vmem>>, vector<16x96xf32>
    tpu.vector_store %arg6[%c0_6, %c0_7], %7 {strides = array<i32>} : memref<16x96xf32, #tpu.memory_space<vmem>>, vector<16x96xf32>,
    %c0_i32_8 = arith.constant 0 : i32
    %9 = arith.cmpi eq, %arg2, %c0_i32_8 : i32
    %10 = arith.extui %9 : i1 to i32
    %c0_i32_9 = arith.constant 0 : i32
    %11 = arith.cmpi ne, %10, %c0_i32_9 : i32
    scf.if %11 {
      %c0_10 = arith.constant 0 : index
      %c0_11 = arith.constant 0 : index
      %12 = vector.load %arg6[%c0_10, %c0_11] : memref<16x96xf32, #tpu.memory_space<vmem>>, vector<16x96xf32>
      %13 = arith.truncf %12 : vector<16x96xf32> to vector<16x96xbf16>
      %c0_12 = arith.constant 0 : index
      %c0_13 = arith.constant 0 : index
      %14 = vector.load %arg5[%c0_12, %c0_13] : memref<16x96xbf16, #tpu.memory_space<vmem>>, vector<16x96xbf16>
      tpu.vector_store %arg5[%c0_12, %c0_13], %13 {strides = array<i32>} : memref<16x96xbf16, #tpu.memory_space<vmem>>, vector<16x96xbf16>,
    } else {
    }
    return
  }
  func.func @transform_0(%arg0: i32, %arg1: i32, %arg2: i32) -> (i32, i32) {
    %c0_i32 = arith.constant 0 : i32
    return %arg0, %arg2 : i32, i32
  }
  func.func @transform_1(%arg0: i32, %arg1: i32, %arg2: i32) -> (i32, i32) {
    %c0_i32 = arith.constant 0 : i32
    return %arg2, %arg1 : i32, i32
  }
  func.func @transform_2(%arg0: i32, %arg1: i32, %arg2: i32) -> (i32, i32) {
    %c0_i32 = arith.constant 0 : i32
    return %arg0, %arg1 : i32, i32
  }
}

</mosaic_0001>

<llo_original>
// kernel: tpu_custom_call.1
$region0: #{tpu_custom_call.1}
  #allocation0 [shape = 'u32[]', space=smem, size = 0x4, offset = 0x4, fixed_abs, tag = 'smem constant byte address 0x4 - core index']
  #allocation1 [shape = 'u32[144,128]{1,0:T(1,128)}', space=vmem, size = 0x12000, scoped, tag = 'internal scratch']
  #allocation2 [shape = 'f32[16,96]{1,0:T(8,128)}', space=vmem, size = 0x2000, scoped, tag = 'scratch operand']
  %s0 = inlined_call_operand.hbm [shape: bf16[16,32], index: 0, kind: input, shape index: {}]
  %s1 = inlined_call_operand.hbm [shape: bf16[32,96], index: 1, kind: input, shape index: {}]
  %s2 = inlined_call_operand.hbm [shape: bf16[16,96], index: 2, kind: output, shape index: {}]
  %s3 = sld [smem:[#allocation0]]
  $region34: #{tpu_custom_call.1} parent=0
    _
  %s5 = ssub.s32 1, %s3
  %s6 = scalar_select 0, %s5, %s3
  $region1: #{tpu_custom_call.1} parent=0
    #allocation3 [shape = 'u8[4096]{0}', space=vmem, size = 0x1000, scoped, tag = 'input window, operand 0, single buffered']
    #allocation4 [shape = 's32[1]{0}', space=sflag, size = 0x4, scoped, tag = 'scoped memory for tpu_custom_call.1']
    #allocation5 [shape = 's32[1]{0}', space=sflag, size = 0x4, scoped, tag = 'scoped memory for tpu_custom_call.1']
    #allocation6 [shape = 'u8[8192]{0}', space=vmem, size = 0x2000, scoped, tag = 'input window, operand 1, single buffered']
    #allocation7 [shape = 's32[1]{0}', space=sflag, size = 0x4, scoped, tag = 'scoped memory for tpu_custom_call.1']
    #allocation8 [shape = 'u8[4096]{0}', space=vmem, size = 0x1000, scoped, tag = 'output window, operand 0, single buffered']
    %7 = vsyncpa [#allocation4], 0
    %8 = vsyncpa [#allocation7], 0
    %9 = vsyncpa [#allocation5], 0
    // Predicated region
    $region2: #{tpu_custom_call.1} parent=1 // pred_check
      _
    $region3: #{tpu_custom_call.1} parent=1 // pred_check_branch
      %11 = sbr.rel (0) target = $region5
    $region4: #{tpu_custom_call.1} parent=1 // pred_region
      %s13 = ssub.s32 128, 128
      %14 = vsyncadd [#allocation4], %s13
      %s15 = sshll.u32 [#allocation3], 4
      %s16 = int_to_ptr.vmem [resolvable:$true] %s15
      %21 = dma.hbm_to_vmem [thread:$0]  %s0, 128, %s16, [#allocation4], 64, 64, 4
    $region5: #{tpu_custom_call.1} parent=1 // pred_fallthru
      _
    // Predicated region
    $region6: #{tpu_custom_call.1} parent=1 // pred_check
      _
    $region7: #{tpu_custom_call.1} parent=1 // pred_check_branch
      %23 = sbr.rel (0) target = $region9
    $region8: #{tpu_custom_call.1} parent=1 // pred_region
      %s25 = ssub.s32 256, 256
      %26 = vsyncadd [#allocation7], %s25
      %s27 = sshll.u32 [#allocation6], 4
      %s28 = int_to_ptr.vmem [resolvable:$true] %s27
      %33 = dma.hbm_to_vmem [thread:$0]  %s1, 256, %s28, [#allocation7], 64, 64, 4
    $region9: #{tpu_custom_call.1} parent=1 // pred_fallthru
      _
    // Predicated region
    $region10: #{tpu_custom_call.1} parent=1 // pred_check
      _
    $region11: #{tpu_custom_call.1} parent=1 // pred_check_branch
      %35 = sbr.rel (0) target = $region13
    $region12: #{tpu_custom_call.1} parent=1 // pred_region
      %36 = dma.done [#allocation4], 128
    $region13: #{tpu_custom_call.1} parent=1 // pred_fallthru
      _
    // Predicated region
    $region14: #{tpu_custom_call.1} parent=1 // pred_check
      _
    $region15: #{tpu_custom_call.1} parent=1 // pred_check_branch
      %38 = sbr.rel (0) target = $region17
    $region16: #{tpu_custom_call.1} parent=1 // pred_region
      %39 = dma.done [#allocation7], 256
    $region17: #{tpu_custom_call.1} parent=1 // pred_fallthru
      _
    %p41 = scmp.eq.s32.totalorder 0, 0
    // Predicated region
    $region18: #{tpu_custom_call.1} parent=1 // pred_check
      %p42 = pneg %p41
    $region19: #{tpu_custom_call.1} parent=1 // pred_check_branch
      %44 = sbr.rel (%p42) target = $region21
    $region20: #{tpu_custom_call.1} parent=1 // pred_region
      %vm45 = vcmask 785408
      %46 = vst.msk [vmem:[#allocation2] sm:$0xff] %vm45, 0.0
      %47 = vst.msk [vmem:[#allocation2 + $0x8] sm:$0xff] %vm45, 0.0
    $region21: #{tpu_custom_call.1} parent=1 // pred_fallthru
      _
    %v48 = vld [vmem:[#allocation2] sm:$0xff]
    %v49 = vld [vmem:[#allocation2 + $0x8] sm:$0xff]
    %v50 = vld [vmem:[#allocation3] sm:$0xf]
    %v51 = vld [vmem:[#allocation3 + $0x4] sm:$0xf]
    %v52 = vld [vmem:[#allocation6] sm:$0xf]
    %v53 = vld [vmem:[#allocation6 + $0x4] sm:$0xf]
    %v54 = vld [vmem:[#allocation6 + $0x8] sm:$0xf]
    %v55 = vld [vmem:[#allocation6 + $0xc] sm:$0xf]
    %v58 = vunpack.c.l.b16 %v50
    %v59 = vunpack.c.l.b16 %v51
    %v60 = vpack.c.b16 %v59, %v58
    %v65 = vunpack.c.l.b16 %v52
    %v66 = vunpack.c.l.b16 %v53
    %v67 = vunpack.c.l.b16 %v54
    %v68 = vunpack.c.l.b16 %v55
    %v69 = vpack.c.b16 %v66, %v65
    %v70 = vpack.c.b16 %v68, %v67
    %vm73 = vcmask 261120
    %v75 = vsel %vm73, %v60, 0
    %77 = vmatprep.subr.bf16.mxu0 0
    %78 = vmatpush1.bf16.msra.mxu0 %v69
    %79 = vmatprep.subr.bf16.mxu0 0
    %80 = vmatpush1.bf16.msra.mxu0 %v70
    %81 = vmatprep.subr.bf16.mxu0 0
    %82 = vmatpush1.bf16.msra.mxu0 0
    %83 = vmatprep.subr.bf16.mxu0 0
    %84 = vmatpush1.bf16.msra.mxu0 0
    %85 = vmatprep.subr.bf16.mxu0 0
    %86 = vmatpush1.bf16.msra.mxu0 0
    %87 = vmatprep.subr.bf16.mxu0 0
    %88 = vmatpush1.bf16.msra.mxu0 0
    %89 = vmatprep.subr.bf16.mxu0 0
    %90 = vmatpush1.bf16.msra.mxu0 0
    %91 = vmatprep.subr.bf16.mxu0 0
    %92 = vmatpush1.bf16.msra.mxu0 0
    %93 = vmatprep.subr.bf16.mxu0 0
    %94 = vmatpush1.bf16.msra.mxu0 0
    %95 = vmatprep.subr.bf16.mxu0 0
    %96 = vmatpush1.bf16.msra.mxu0 0
    %97 = vmatprep.subr.bf16.mxu0 0
    %98 = vmatpush1.bf16.msra.mxu0 0
    %99 = vmatprep.subr.bf16.mxu0 0
    %100 = vmatpush1.bf16.msra.mxu0 0
    %101 = vmatprep.subr.bf16.mxu0 0
    %102 = vmatpush1.bf16.msra.mxu0 0
    %103 = vmatprep.subr.bf16.mxu0 0
    %104 = vmatpush1.bf16.msra.mxu0 0
    %105 = vmatprep.subr.bf16.mxu0 0
    %106 = vmatpush1.bf16.msra.mxu0 0
    %107 = vmatprep.subr.bf16.mxu0 0
    %108 = vmatpush1.bf16.msra.mxu0 0
    %109 = vmatprep.mubr.bf16.mxu0 0
    %110 = vmatmul.mubr.bf16.gmra.mrb[0].mxu0 %v75
    %v111 = vpop.f32.mrb[0].mxu0
    %v112 = vadd.f32 0.0, %v111
    %v113 = vpop.f32.mrb[0].mxu0
    %v114 = vpop.f32.mrb[0].mxu0
    %v115 = vadd.f32 0.0, %v114
    %v116 = vpop.f32.mrb[0].mxu0
    %117 = vdwg.mxu0
    %v118 = vadd.f32 %v48, %v112
    %v119 = vadd.f32 %v49, %v115
    %vm120 = vcmask 785408
    %121 = vst.msk [vmem:[#allocation2] sm:$0xff] %vm120, %v118
    %122 = vst.msk [vmem:[#allocation2 + $0x8] sm:$0xff] %vm120, %v119
    // Predicated region
    $region22: #{tpu_custom_call.1} parent=1 // pred_check
      %p123 = pneg %p41
    $region23: #{tpu_custom_call.1} parent=1 // pred_check_branch
      %125 = sbr.rel (%p123) target = $region25
    $region24: #{tpu_custom_call.1} parent=1 // pred_region
      %v126 = vld [vmem:[#allocation2] sm:$0xff]
      %v127 = vld [vmem:[#allocation2 + $0x8] sm:$0xff]
      %v128 = vpack.c.bf16 %v127, %v126
      %v130 = vunpack.c.l.b16 %v128
      %v131 = vunpack.c.h.b16 %v128
      %v132 = vpack.c.b16 %v130, %v130
      %v133 = vpack.c.b16 %v131, %v131
      %vm136 = vcmask 781312
      %137 = vst.msk [vmem:[#allocation8] sm:$0xf] %vm136, %v132
      %138 = vst.msk [vmem:[#allocation8 + $0x4] sm:$0xf] %vm136, %v133
    $region25: #{tpu_custom_call.1} parent=1 // pred_fallthru
      _
    // Predicated region
    $region26: #{tpu_custom_call.1} parent=1 // pred_check
      _
    $region27: #{tpu_custom_call.1} parent=1 // pred_check_branch
      %140 = sbr.rel (0) target = $region29
    $region28: #{tpu_custom_call.1} parent=1 // pred_region
      %s142 = ssub.s32 128, 128
      %143 = vsyncadd [#allocation5], %s142
      %s144 = sshll.u32 [#allocation8], 4
      %s145 = int_to_ptr.vmem [resolvable:$true] %s144
      %150 = dma.vmem_to_hbm [thread:$0]  %s145, 128, %s2, [#allocation5], 64, 64, 4
    $region29: #{tpu_custom_call.1} parent=1 // pred_fallthru
      _
    // Predicated region
    $region30: #{tpu_custom_call.1} parent=1 // pred_check
      _
    $region31: #{tpu_custom_call.1} parent=1 // pred_check_branch
      %152 = sbr.rel (0) target = $region33
    $region32: #{tpu_custom_call.1} parent=1 // pred_region
      %153 = dma.done [#allocation5], 128
    $region33: #{tpu_custom_call.1} parent=1 // pred_fallthru
      _
    %154 = vsyncpa [#allocation4], 1
    %155 = vsyncpa [#allocation7], 1
    %156 = vsyncpa [#allocation5], 1

</llo_original>
